<compile_context>
chip_gen: v7x
topology: tpu7x:2x2x1
jax: 0.10.0
libtpu: 0.0.40
codegen_flags: <defaults>
</compile_context>

<pallas_src>
import functools

import jax
import jax.numpy as jnp
from jax.experimental import pallas as pl
from jax.experimental.pallas import tpu as pltpu


def _round_up(a, b):
    return (a + b - 1) // b * b


# ---------------------------------------------------------------------------
# Weight packing — call ONCE at model load, not per forward call.
# PyTorch nn.Linear stores (out_features, in_features); the kernel wants
# Wi as (d_model, d_ff) and Wo as (d_ff, d_model), bf16, d_ff padded to a
# multiple of 128 (lane alignment). Padded columns/rows contribute exactly 0.
# ---------------------------------------------------------------------------
def pack_t5_ff_weights(wi_weight, wo_weight, dtype=jnp.bfloat16):
    d_ff, _ = wi_weight.shape
    ff_pad = _round_up(d_ff, 128)
    wi_p = jnp.asarray(wi_weight).T.astype(dtype)     # (d_model, d_ff)
    wo_p = jnp.asarray(wo_weight).T.astype(dtype)     # (d_ff, d_model)
    if ff_pad != d_ff:
        wi_p = jnp.pad(wi_p, ((0, 0), (0, ff_pad - d_ff)))
        wo_p = jnp.pad(wo_p, ((0, ff_pad - d_ff), (0, 0)))
    return wi_p, wo_p


# ---------------------------------------------------------------------------
# Kernels
# ---------------------------------------------------------------------------
def _ff_kernel_fused(x_ref, ln_w_ref, wi_ref, wo_ref, o_ref, *, eps):
    """Weights fully VMEM-resident (single d_ff block): whole FFN per row tile."""
    xf = x_ref[...].astype(jnp.float32)                          # (TM, D)
    var = jnp.mean(xf * xf, axis=-1, keepdims=True)              # RMS, no mean sub
    xn = (xf * jax.lax.rsqrt(var + eps)) * ln_w_ref[...].astype(jnp.float32)
    xn = xn.astype(wi_ref.dtype)
    h = jnp.dot(xn, wi_ref[...], preferred_element_type=jnp.float32)
    h = jnp.maximum(h, 0.0)                                      # ReLU (f32, VPU)
    ff = jnp.dot(h.astype(wo_ref.dtype), wo_ref[...],
                 preferred_element_type=jnp.float32)
    o_ref[...] = (xf + ff).astype(o_ref.dtype)                   # residual in f32


def _ff_kernel_streamed(x_ref, ln_w_ref, wi_ref, wo_ref, o_ref,
                        xn_ref, acc_ref, *, eps):
    """(row tile i, d_ff block k):  acc (+)= relu(xn @ Wi[:, k]) @ Wo[k, :]."""
    k = pl.program_id(1)

    # LayerNorm once per row tile, cached in bf16 for the MXU.
    @pl.when(k == 0)
    def _():
        xf = x_ref[...].astype(jnp.float32)
        var = jnp.mean(xf * xf, axis=-1, keepdims=True)
        xn = (xf * jax.lax.rsqrt(var + eps)) * ln_w_ref[...].astype(jnp.float32)
        xn_ref[...] = xn.astype(xn_ref.dtype)

    h = jnp.dot(xn_ref[...], wi_ref[...], preferred_element_type=jnp.float32)
    h = jnp.maximum(h, 0.0)
    prod = jnp.dot(h.astype(wo_ref.dtype), wo_ref[...],
                   preferred_element_type=jnp.float32)

    # No zero-init: write first partial product directly (saves a full
    # (tile_m, D) f32 store + reload per row tile).
    @pl.when(k == 0)
    def _():
        acc_ref[...] = prod

    @pl.when(k > 0)
    def _():
        acc_ref[...] += prod

    @pl.when(k == pl.num_programs(1) - 1)
    def _():
        o_ref[...] = (x_ref[...].astype(jnp.float32)
                      + acc_ref[...]).astype(o_ref.dtype)


# ---------------------------------------------------------------------------
# Tile selection / VMEM budgeting
# ---------------------------------------------------------------------------
def _vmem_capacity_bytes():
    try:
        cap = int(pltpu.get_tpu_info().vmem_capacity_bytes)
        if cap > 0:
            return cap
    except Exception:
        pass
    return 64 << 20          # conservative fallback: v7x per-TC VMEM


def _vmem_bytes(tile_m, tile_ff, d_model, x_itemsize, w_itemsize, multi_k):
    b = 0
    b += 2 * tile_m * d_model * x_itemsize        # x blocks (double buffered)
    b += 2 * tile_m * d_model * x_itemsize        # out blocks
    b += 2 * d_model * tile_ff * w_itemsize       # Wi blocks (2 buffers)
    b += 2 * tile_ff * d_model * w_itemsize       # Wo blocks (2 buffers)
    b += 2 * d_model * 4                          # LN weight blocks
    b += 6 * tile_m * tile_ff                     # h (f32) + bf16 cast intermediate
    if multi_k:
        b += tile_m * d_model * (w_itemsize + 4)  # xn cache + f32 accumulator
    b += 2 << 20                                  # compiler scratch headroom
    return b


def _pick_tile_m(n_rows, row_tile):
    """Row tile: multiple of 8, preferably a divisor of the 8-padded row count
    so no padded copy of x is materialized in HBM."""
    n8 = _round_up(max(n_rows, 1), 8)
    row_tile = max(8, _round_up(row_tile, 8))
    if n8 <= row_tile:
        return n8, n8
    best = 8
    d = 8
    while d <= row_tile:
        if n8 % d == 0:
            best = d
        d += 8
    if best >= row_tile // 2:
        return best, n8
    return row_tile, _round_up(n_rows, row_tile)


def _select_tiles(n_rows, d_model, ff_pad, x_itemsize, w_itemsize,
                  row_tile, ff_cap, usable):
    ff_cands = [c for c in range(128, ff_pad + 1, 128) if ff_pad % c == 0]
    ff_cands.sort(reverse=True)
    if ff_cap is not None:
        capped = [c for c in ff_cands if c <= ff_cap]
        if capped:
            ff_cands = capped
    tile_m, n_pad = _pick_tile_m(n_rows, row_tile)
    while True:
        for tff in ff_cands:
            multi_k = tff != ff_pad
            if _vmem_bytes(tile_m, tff, d_model, x_itemsize,
                           w_itemsize, multi_k) <= usable:
                return tile_m, n_pad, tff, multi_k
        if tile_m <= 8:
            tff = ff_cands[-1]
            return tile_m, n_pad, tff, tff != ff_pad
        tile_m, n_pad = _pick_tile_m(n_rows, max(8, tile_m // 2))


# ---------------------------------------------------------------------------
# Wrapper
# ---------------------------------------------------------------------------
def t5_layer_ff(x, ln_weight, wi_packed, wo_packed, *, eps=1e-6,
                row_tile=512, ff_tile=None):
    """T5LayerFF forward:  y = x + Wo(relu(Wi(T5LayerNorm(x)))).

    x: (B, S, d_model).
    wi_packed: (d_model, ff_pad) bf16, wo_packed: (ff_pad, d_model) bf16 —
    produced once by pack_t5_ff_weights().  ff_tile (optional) caps the d_ff
    block size (useful for testing the streamed path)."""
    B, S, D = x.shape
    ff_pad = wi_packed.shape[1]
    assert wi_packed.shape[0] == D and wo_packed.shape == (ff_pad, D)
    assert ff_pad % 128 == 0
    N = B * S

    capacity = _vmem_capacity_bytes()
    usable = int(0.85 * capacity)
    x_itemsize = jnp.dtype(x.dtype).itemsize
    w_itemsize = jnp.dtype(wi_packed.dtype).itemsize

    tile_m, n_pad, tile_ff, multi_k = _select_tiles(
        N, D, ff_pad, x_itemsize, w_itemsize, row_tile, ff_tile, usable)

    # Megacore (v7x): give the 'parallel' row axis >= 2 tiles when weights are
    # VMEM-resident (the split then adds no extra weight traffic).
    if (not multi_k) and n_pad // tile_m == 1 and tile_m >= 512 and tile_m % 16 == 0:
        tile_m //= 2

    x2 = x.reshape(N, D)
    if n_pad != N:
        x2 = jnp.pad(x2, ((0, n_pad - N), (0, 0)))   # zero rows -> zero output rows

    ln_w = jnp.asarray(ln_weight).reshape(1, D).astype(jnp.float32)

    n_row_tiles = n_pad // tile_m
    grid_k = ff_pad // tile_ff

    # Advisory cost estimate (weights are re-streamed once per row tile only
    # when the d_ff axis is blocked; otherwise they are fetched exactly once).
    weight_passes = n_row_tiles if multi_k else 1
    flops = 4 * N * D * ff_pad
    bytes_accessed = int(2 * N * D * x_itemsize
                         + weight_passes * (wi_packed.size + wo_packed.size) * w_itemsize
                         + D * 4)
    cost = pl.CostEstimate(flops=flops, transcendentals=N,
                           bytes_accessed=bytes_accessed)

    vmem_limit = int(min(capacity, 110 << 20))

    if multi_k:
        kernel = functools.partial(_ff_kernel_streamed, eps=eps)
        grid = (n_row_tiles, grid_k)
        in_specs = [
            pl.BlockSpec((tile_m, D), lambda i, k: (i, 0)),    # x rows (resident over k)
            pl.BlockSpec((1, D), lambda i, k: (0, 0)),         # LN weight
            pl.BlockSpec((D, tile_ff), lambda i, k: (0, k)),   # Wi blocks, streamed
            pl.BlockSpec((tile_ff, D), lambda i, k: (k, 0)),   # Wo blocks, streamed
        ]
        out_specs = pl.BlockSpec((tile_m, D), lambda i, k: (i, 0))
        scratch_shapes = [
            pltpu.VMEM((tile_m, D), wi_packed.dtype),   # cached x_norm (bf16)
            pltpu.VMEM((tile_m, D), jnp.float32),       # f32 FFN accumulator
        ]
        dim_sem = ("parallel", "arbitrary")
    else:
        kernel = functools.partial(_ff_kernel_fused, eps=eps)
        grid = (n_row_tiles,)
        in_specs = [
            pl.BlockSpec((tile_m, D), lambda i: (i, 0)),
            pl.BlockSpec((1, D), lambda i: (0, 0)),
            pl.BlockSpec((D, ff_pad), lambda i: (0, 0)),   # constant index: DMA'd once
            pl.BlockSpec((ff_pad, D), lambda i: (0, 0)),
        ]
        out_specs = pl.BlockSpec((tile_m, D), lambda i: (i, 0))
        scratch_shapes = []
        dim_sem = ("parallel",)

    out = pl.pallas_call(
        kernel,
        out_shape=jax.ShapeDtypeStruct((n_pad, D), x.dtype),
        grid_spec=pltpu.PrefetchScalarGridSpec(
            num_scalar_prefetch=0,
            grid=grid,
            in_specs=in_specs,
            out_specs=out_specs,
            scratch_shapes=scratch_shapes,
        ),
        compiler_params=pltpu.CompilerParams(
            dimension_semantics=dim_sem,
            vmem_limit_bytes=vmem_limit,
        ),
        cost_estimate=cost,
    )(x2, ln_w, wi_packed, wo_packed)

    if n_pad != N:
        out = out[:N]
    return out.reshape(B, S, D)


def t5_layer_ff_ref(x, ln_weight, wi_weight, wo_weight, eps=1e-6):
    """Pure-JAX reference with the same matmul precision (bf16 in, f32 acc).
    Takes PyTorch-layout weights: wi (d_ff, d_model), wo (d_model, d_ff)."""
    xf = x.astype(jnp.float32)
    var = jnp.mean(xf * xf, axis=-1, keepdims=True)
    xn = ln_weight.astype(jnp.float32) * (xf * jax.lax.rsqrt(var + eps))
    xn = xn.astype(jnp.bfloat16)
    h = jnp.dot(xn, wi_weight.T.astype(jnp.bfloat16),
                preferred_element_type=jnp.float32)
    h = jnp.maximum(h, 0.0)
    ff = jnp.dot(h.astype(jnp.bfloat16), wo_weight.T.astype(jnp.bfloat16),
                 preferred_element_type=jnp.float32)
    return (xf + ff).astype(x.dtype)


if __name__ == "__main__":
    key = jax.random.PRNGKey(0)
    eps = 1e-6

    # --- test 1: small config (fused path, weights fully VMEM-resident) ---
    B, S, d_model, d_ff = 2, 8, 32, 64
    kx, kwi, kwo = jax.random.split(key, 3)
    x = jax.random.normal(kx, (B, S, d_model), dtype=jnp.float32)
    ln_weight = jnp.ones((d_model,), dtype=jnp.float32)          # T5LayerNorm init: ones
    wi_weight = jax.random.normal(kwi, (d_ff, d_model), dtype=jnp.float32) * 0.05
    wo_weight = jax.random.normal(kwo, (d_model, d_ff), dtype=jnp.float32) * 0.05

    wi_p, wo_p = pack_t5_ff_weights(wi_weight, wo_weight)        # pack once
    out = jax.block_until_ready(t5_layer_ff(x, ln_weight, wi_p, wo_p, eps=eps))
    ref = t5_layer_ff_ref(x, ln_weight, wi_weight, wo_weight, eps=eps)
    assert out.shape == (B, S, d_model)
    assert jnp.allclose(out, ref, atol=2e-4, rtol=2e-4), "mismatch vs reference (test 1)"

    # --- test 2: exercises the streamed (d_ff-blocked) accumulator path ---
    B2, S2, dm2, dff2 = 2, 24, 128, 512
    k2 = jax.random.PRNGKey(1)
    kx2, kln2, kwi2, kwo2 = jax.random.split(k2, 4)
    x2 = jax.random.normal(kx2, (B2, S2, dm2), dtype=jnp.float32)
    ln2 = 1.0 + 0.1 * jax.random.normal(kln2, (dm2,), dtype=jnp.float32)
    wi2 = jax.random.normal(kwi2, (dff2, dm2), dtype=jnp.float32) * 0.03
    wo2 = jax.random.normal(kwo2, (dm2, dff2), dtype=jnp.float32) * 0.03

    wi2_p, wo2_p = pack_t5_ff_weights(wi2, wo2)
    out2 = jax.block_until_ready(
        t5_layer_ff(x2, ln2, wi2_p, wo2_p, eps=eps, row_tile=512, ff_tile=256))
    ref2 = t5_layer_ff_ref(x2, ln2, wi2, wo2, eps=eps)
    assert out2.shape == (B2, S2, dm2)
    assert jnp.allclose(out2, ref2, atol=5e-4, rtol=5e-4), "mismatch vs reference (test 2)"

    print("KERNEL_OK")
</pallas_src>

<mosaic_0001>
module attributes {stable_mosaic.version = 11 : i64} {
  func.func @_ff_kernel_fused(%arg0: i32, %arg1: memref<16x32xf32, #tpu.memory_space<vmem>>, %arg2: memref<1x32xf32, #tpu.memory_space<vmem>>, %arg3: memref<32x128xbf16, #tpu.memory_space<vmem>>, %arg4: memref<128x32xbf16, #tpu.memory_space<vmem>>, %arg5: memref<16x32xf32, #tpu.memory_space<vmem>>) attributes {dimension_semantics = [#tpu.dimension_semantics<parallel>], iteration_bounds = array<i64: 1>, scalar_prefetch = 0 : i64, scratch_operands = 0 : i64, tpu.core_type = #tpu.core_type<tc>, window_params = [{transform_indices = @transform_0, window_bounds = array<i64: 16, 32>}, {pipeline_mode = #tpu.pipeline_mode<synchronous>, transform_indices = @transform_1, window_bounds = array<i64: 1, 32>}, {pipeline_mode = #tpu.pipeline_mode<synchronous>, transform_indices = @transform_2, window_bounds = array<i64: 32, 128>}, {pipeline_mode = #tpu.pipeline_mode<synchronous>, transform_indices = @transform_3, window_bounds = array<i64: 128, 32>}, {transform_indices = @transform_4, window_bounds = array<i64: 16, 32>}]} {
    %c0 = arith.constant 0 : index
    %c0_0 = arith.constant 0 : index
    %0 = vector.load %arg1[%c0, %c0_0] : memref<16x32xf32, #tpu.memory_space<vmem>>, vector<16x32xf32>
    %1 = arith.mulf %0, %0 : vector<16x32xf32>
    %cst = arith.constant dense<0.000000e+00> : vector<16xf32>
    %2 = vector.multi_reduction <add>, %1, %cst [1] : vector<16x32xf32> to vector<16xf32>
    %3 = vector.shape_cast %2 : vector<16xf32> to vector<16x1xf32>
    %cst_1 = arith.constant 3.200000e+01 : f32
    %4 = vector.broadcast %cst_1 : f32 to vector<16x1xf32>
    %5 = arith.divf %3, %4 : vector<16x1xf32>
    %cst_2 = arith.constant 9.99999997E-7 : f32
    %6 = vector.broadcast %cst_2 : f32 to vector<16x1xf32>
    %7 = arith.addf %5, %6 : vector<16x1xf32>
    %8 = math.rsqrt %7 : vector<16x1xf32>
    %9 = vector.broadcast %8 : vector<16x1xf32> to vector<16x32xf32>
    %10 = arith.mulf %0, %9 : vector<16x32xf32>
    %c0_3 = arith.constant 0 : index
    %c0_4 = arith.constant 0 : index
    %11 = vector.load %arg2[%c0_3, %c0_4] : memref<1x32xf32, #tpu.memory_space<vmem>>, vector<1x32xf32>
    %12 = vector.broadcast %11 : vector<1x32xf32> to vector<16x32xf32>
    %13 = arith.mulf %10, %12 : vector<16x32xf32>
    %14 = arith.truncf %13 : vector<16x32xf32> to vector<16x32xbf16>
    %c0_5 = arith.constant 0 : index
    %c0_6 = arith.constant 0 : index
    %15 = vector.load %arg3[%c0_5, %c0_6] : memref<32x128xbf16, #tpu.memory_space<vmem>>, vector<32x128xbf16>
    %cst_7 = arith.constant dense<0.000000e+00> : vector<16x128xf32>
    %16 = tpu.matmul %14, %15, %cst_7 {dimension_numbers = #tpu.dot_dimension_numbers<[1], [0], [0], [1], [0, 0, 1, 1], [], []>} : vector<16x32xbf16>, vector<32x128xbf16>, vector<16x128xf32> -> vector<16x128xf32>
    %cst_8 = arith.constant 0.000000e+00 : f32
    %17 = vector.broadcast %cst_8 : f32 to vector<16x128xf32>
    %18 = arith.maximumf %16, %17 : vector<16x128xf32>
    %19 = arith.truncf %18 : vector<16x128xf32> to vector<16x128xbf16>
    %c0_9 = arith.constant 0 : index
    %c0_10 = arith.constant 0 : index
    %20 = vector.load %arg4[%c0_9, %c0_10] : memref<128x32xbf16, #tpu.memory_space<vmem>>, vector<128x32xbf16>
    %cst_11 = arith.constant dense<0.000000e+00> : vector<16x32xf32>
    %21 = tpu.matmul %19, %20, %cst_11 {dimension_numbers = #tpu.dot_dimension_numbers<[1], [0], [0], [1], [0, 0, 1, 1], [], []>} : vector<16x128xbf16>, vector<128x32xbf16>, vector<16x32xf32> -> vector<16x32xf32>
    %22 = arith.addf %0, %21 : vector<16x32xf32>
    %c0_12 = arith.constant 0 : index
    %c0_13 = arith.constant 0 : index
    %23 = vector.load %arg5[%c0_12, %c0_13] : memref<16x32xf32, #tpu.memory_space<vmem>>, vector<16x32xf32>
    tpu.vector_store %arg5[%c0_12, %c0_13], %22 {strides = array<i32>} : memref<16x32xf32, #tpu.memory_space<vmem>>, vector<16x32xf32>,
    return
  }
  func.func @transform_0(%arg0: i32) -> (i32, i32) {
    %c0_i32 = arith.constant 0 : i32
    %c0_i32_0 = arith.constant 0 : i32
    return %arg0, %c0_i32 : i32, i32
  }
  func.func @transform_1(%arg0: i32) -> (i32, i32) {
    %c0_i32 = arith.constant 0 : i32
    %c0_i32_0 = arith.constant 0 : i32
    %c0_i32_1 = arith.constant 0 : i32
    return %c0_i32, %c0_i32_0 : i32, i32
  }
  func.func @transform_2(%arg0: i32) -> (i32, i32) {
    %c0_i32 = arith.constant 0 : i32
    %c0_i32_0 = arith.constant 0 : i32
    %c0_i32_1 = arith.constant 0 : i32
    return %c0_i32, %c0_i32_0 : i32, i32
  }
  func.func @transform_3(%arg0: i32) -> (i32, i32) {
    %c0_i32 = arith.constant 0 : i32
    %c0_i32_0 = arith.constant 0 : i32
    %c0_i32_1 = arith.constant 0 : i32
    return %c0_i32, %c0_i32_0 : i32, i32
  }
  func.func @transform_4(%arg0: i32) -> (i32, i32) {
    %c0_i32 = arith.constant 0 : i32
    %c0_i32_0 = arith.constant 0 : i32
    return %arg0, %c0_i32 : i32, i32
  }
}

</mosaic_0001>

<llo_original>
// kernel: tpu_custom_call.1
$region0: #{tpu_custom_call.1}
  #allocation0 [shape = 'u32[]', space=smem, size = 0x4, offset = 0x4, fixed_abs, tag = 'smem constant byte address 0x4 - core index']
  #allocation1 [shape = 'u32[144,128]{1,0:T(1,128)}', space=vmem, size = 0x12000, scoped, tag = 'internal scratch']
  %s0 = inlined_call_operand.hbm [shape: f32[16,32], index: 0, kind: input, shape index: {}]
  %s1 = inlined_call_operand.hbm [shape: f32[1,32], index: 1, kind: input, shape index: {}]
  %s2 = inlined_call_operand.hbm [shape: bf16[32,128], index: 2, kind: input, shape index: {}]
  %s3 = inlined_call_operand.hbm [shape: bf16[128,32], index: 3, kind: input, shape index: {}]
  %s4 = inlined_call_operand.hbm [shape: f32[16,32], index: 4, kind: output, shape index: {}]
  %s5 = sld [smem:[#allocation0]]
  $region42: #{tpu_custom_call.1} parent=0
    _
  %s7 = ssub.s32 1, %s5
  %s8 = scalar_select 0, %s7, %s5
  $region1: #{tpu_custom_call.1} parent=0
    #allocation2 [shape = 'u8[8192]{0}', space=vmem, size = 0x2000, scoped, tag = 'input window, operand 0, single buffered']
    #allocation3 [shape = 's32[1]{0}', space=sflag, size = 0x4, scoped, tag = 'scoped memory for tpu_custom_call.1']
    #allocation4 [shape = 's32[1]{0}', space=sflag, size = 0x4, scoped, tag = 'scoped memory for tpu_custom_call.1']
    #allocation5 [shape = 'u8[512]{0}', space=vmem, size = 0x400, scoped, tag = 'input window, operand 1, single buffered']
    #allocation6 [shape = 's32[1]{0}', space=sflag, size = 0x4, scoped, tag = 'scoped memory for tpu_custom_call.1']
    #allocation7 [shape = 'u8[8192]{0}', space=vmem, size = 0x2000, scoped, tag = 'input window, operand 2, single buffered']
    #allocation8 [shape = 'u8[32768]{0}', space=vmem, size = 0x8000, scoped, tag = 'input window, operand 3, single buffered']
    #allocation9 [shape = 's32[1]{0}', space=sflag, size = 0x4, scoped, tag = 'scoped memory for tpu_custom_call.1']
    #allocation10 [shape = 'u8[8192]{0}', space=vmem, size = 0x2000, scoped, tag = 'output window, operand 0, single buffered']
    %9 = vsyncpa [#allocation3], 0
    %10 = vsyncpa [#allocation6], 0
    %11 = vsyncpa [#allocation9], 0
    %12 = vsyncpa [#allocation4], 0
    // Predicated region
    $region2: #{tpu_custom_call.1} parent=1 // pred_check
      _
    $region3: #{tpu_custom_call.1} parent=1 // pred_check_branch
      %14 = sbr.rel (0) target = $region5
    $region4: #{tpu_custom_call.1} parent=1 // pred_region
      %s16 = ssub.s32 256, 256
      %17 = vsyncadd [#allocation3], %s16
      %s18 = sshll.u32 [#allocation2], 4
      %s19 = int_to_ptr.vmem [resolvable:$true] %s18
      %24 = dma.hbm_to_vmem [thread:$0]  %s0, 256, %s19, [#allocation3], 128, 128, 8
    $region5: #{tpu_custom_call.1} parent=1 // pred_fallthru
      _
    // Predicated region
    $region6: #{tpu_custom_call.1} parent=1 // pred_check
      _
    $region7: #{tpu_custom_call.1} parent=1 // pred_check_branch
      %26 = sbr.rel (0) target = $region9
    $region8: #{tpu_custom_call.1} parent=1 // pred_region
      %s28 = ssub.s32 16, 16
      %29 = vsyncadd [#allocation6], %s28
      %s31 = sshll.u32 [#allocation5], 4
      %s32 = int_to_ptr.vmem [resolvable:$true] %s31
      %34 = dma.hbm_to_vmem [thread:$0]  %s1, 16, %s32, [#allocation6]
    $region9: #{tpu_custom_call.1} parent=1 // pred_fallthru
      _
    // Predicated region
    $region10: #{tpu_custom_call.1} parent=1 // pred_check
      _
    $region11: #{tpu_custom_call.1} parent=1 // pred_check_branch
      %36 = sbr.rel (0) target = $region13
    $region12: #{tpu_custom_call.1} parent=1 // pred_region
      %s38 = ssub.s32 256, 256
      %39 = vsyncadd [#allocation6], %s38
      %s40 = sshll.u32 [#allocation7], 4
      %s41 = int_to_ptr.vmem [resolvable:$true] %s40
      %46 = dma.hbm_to_vmem [thread:$0]  %s2, 256, %s41, [#allocation6], 64, 64, 4
    $region13: #{tpu_custom_call.1} parent=1 // pred_fallthru
      _
    // Predicated region
    $region14: #{tpu_custom_call.1} parent=1 // pred_check
      _
    $region15: #{tpu_custom_call.1} parent=1 // pred_check_branch
      %48 = sbr.rel (0) target = $region17
    $region16: #{tpu_custom_call.1} parent=1 // pred_region
      %s50 = ssub.s32 1024, 1024
      %51 = vsyncadd [#allocation9], %s50
      %s52 = sshll.u32 [#allocation8], 4
      %s53 = int_to_ptr.vmem [resolvable:$true] %s52
      %58 = dma.hbm_to_vmem [thread:$0]  %s3, 1024, %s53, [#allocation9], 64, 64, 4
    $region17: #{tpu_custom_call.1} parent=1 // pred_fallthru
      _
    // Predicated region
    $region18: #{tpu_custom_call.1} parent=1 // pred_check
      _
    $region19: #{tpu_custom_call.1} parent=1 // pred_check_branch
      %60 = sbr.rel (0) target = $region21
    $region20: #{tpu_custom_call.1} parent=1 // pred_region
      %61 = dma.done [#allocation3], 256
    $region21: #{tpu_custom_call.1} parent=1 // pred_fallthru
      _
    // Predicated region
    $region22: #{tpu_custom_call.1} parent=1 // pred_check
      _
    $region23: #{tpu_custom_call.1} parent=1 // pred_check_branch
      %63 = sbr.rel (0) target = $region25
    $region24: #{tpu_custom_call.1} parent=1 // pred_region
      %64 = dma.done [#allocation6], 16
    $region25: #{tpu_custom_call.1} parent=1 // pred_fallthru
      _
    // Predicated region
    $region26: #{tpu_custom_call.1} parent=1 // pred_check
      _
    $region27: #{tpu_custom_call.1} parent=1 // pred_check_branch
      %66 = sbr.rel (0) target = $region29
    $region28: #{tpu_custom_call.1} parent=1 // pred_region
      %67 = dma.done [#allocation6], 256
    $region29: #{tpu_custom_call.1} parent=1 // pred_fallthru
      _
    // Predicated region
    $region30: #{tpu_custom_call.1} parent=1 // pred_check
      _
    $region31: #{tpu_custom_call.1} parent=1 // pred_check_branch
      %69 = sbr.rel (0) target = $region33
    $region32: #{tpu_custom_call.1} parent=1 // pred_region
      %70 = dma.done [#allocation9], 1024
    $region33: #{tpu_custom_call.1} parent=1 // pred_fallthru
      _
    %v72 = vld [vmem:[#allocation2] sm:$0xff]
    %v73 = vld [vmem:[#allocation2 + $0x8] sm:$0xff]
    %v74 = vmul.f32 %v72, %v72
    %v75 = vmul.f32 %v73, %v73
    %vm76 = vcmask 261120
    %v77 = vsel %vm76, %v74, 0.0
    %78 = vadd.xlane.f32.xlu0 %v77
    %v79 = vpop.xlane.xlu0 %78
    %v80 = vsel %vm76, %v75, 0.0
    %81 = vadd.xlane.f32.xlu0 %v80
    %v82 = vpop.xlane.xlu0 %81
    %v83 = vrcp.pop 32.0
    %v84 = vmul.f32 %v79, %v83
    %v85 = vmul.f32 %v82, %v83
    %v86 = vadd.f32 %v84, 1e-06
    %v87 = vadd.f32 %v85, 1e-06
    %v88 = vrsqrt.pop %v86
    %v89 = vrsqrt.pop %v87
    %v90 = vmul.f32 %v72, %v88
    %v91 = vmul.f32 %v73, %v89
    %v92 = vld [vmem:[#allocation5] sm:$0x1]
    %v94 = vlaneseq
    %v95 = vshrl.u32 %v94, 7
    %v96 = vsub.s32 0, %v95
    %v97 = vrot.slane %v92, %v96
    %v99 = vmul.f32 %v90, %v97
    %v100 = vmul.f32 %v91, %v97
    %v101 = vpack.c.bf16 %v100, %v99
    %v102 = vld [vmem:[#allocation7] sm:$0xf]
    %v103 = vld [vmem:[#allocation7 + $0x4] sm:$0xf]
    %v104 = vld [vmem:[#allocation7 + $0x8] sm:$0xf]
    %v105 = vld [vmem:[#allocation7 + $0xc] sm:$0xf]
    %v110 = vunpack.c.l.b16 %v102
    %v111 = vunpack.c.l.b16 %v103
    %v112 = vunpack.c.l.b16 %v104
    %v113 = vunpack.c.l.b16 %v105
    %v114 = vpack.c.b16 %v111, %v110
    %v115 = vpack.c.b16 %v113, %v112
    %v119 = vsel %vm76, %v101, 0
    %121 = vmatprep.subr.bf16.mxu0 0
    %122 = vmatpush1.bf16.msra.mxu0 %v114
    %123 = vmatprep.subr.bf16.mxu0 0
    %124 = vmatpush1.bf16.msra.mxu0 %v115
    %125 = vmatprep.subr.bf16.mxu0 0
    %126 = vmatpush1.bf16.msra.mxu0 0
    %127 = vmatprep.subr.bf16.mxu0 0
    %128 = vmatpush1.bf16.msra.mxu0 0
    %129 = vmatprep.subr.bf16.mxu0 0
    %130 = vmatpush1.bf16.msra.mxu0 0
    %131 = vmatprep.subr.bf16.mxu0 0
    %132 = vmatpush1.bf16.msra.mxu0 0
    %133 = vmatprep.subr.bf16.mxu0 0
    %134 = vmatpush1.bf16.msra.mxu0 0
    %135 = vmatprep.subr.bf16.mxu0 0
    %136 = vmatpush1.bf16.msra.mxu0 0
    %137 = vmatprep.subr.bf16.mxu0 0
    %138 = vmatpush1.bf16.msra.mxu0 0
    %139 = vmatprep.subr.bf16.mxu0 0
    %140 = vmatpush1.bf16.msra.mxu0 0
    %141 = vmatprep.subr.bf16.mxu0 0
    %142 = vmatpush1.bf16.msra.mxu0 0
    %143 = vmatprep.subr.bf16.mxu0 0
    %144 = vmatpush1.bf16.msra.mxu0 0
    %145 = vmatprep.subr.bf16.mxu0 0
    %146 = vmatpush1.bf16.msra.mxu0 0
    %147 = vmatprep.subr.bf16.mxu0 0
    %148 = vmatpush1.bf16.msra.mxu0 0
    %149 = vmatprep.subr.bf16.mxu0 0
    %150 = vmatpush1.bf16.msra.mxu0 0
    %151 = vmatprep.subr.bf16.mxu0 0
    %152 = vmatpush1.bf16.msra.mxu0 0
    %153 = vmatprep.mubr.bf16.mxu0 0
    %154 = vmatmul.mubr.bf16.gmra.mrb[0].mxu0 %v119
    %v155 = vpop.f32.mrb[0].mxu0
    %v156 = vadd.f32 0.0, %v155
    %v157 = vpop.f32.mrb[0].mxu0
    %v158 = vpop.f32.mrb[0].mxu0
    %v159 = vadd.f32 0.0, %v158
    %v160 = vpop.f32.mrb[0].mxu0
    %161 = vdwg.mxu0
    %v162 = vmax.f32 %v156, 0.0
    %v163 = vmax.f32 %v159, 0.0
    %v164 = vpack.c.bf16 %v163, %v162
    %v165 = vld [vmem:[#allocation8] sm:$0xf]
    %v166 = vld [vmem:[#allocation8 + $0x4] sm:$0xf]
    %v167 = vld [vmem:[#allocation8 + $0x8] sm:$0xf]
    %v168 = vld [vmem:[#allocation8 + $0xc] sm:$0xf]
    %v169 = vld [vmem:[#allocation8 + $0x10] sm:$0xf]
    %v170 = vld [vmem:[#allocation8 + $0x14] sm:$0xf]
    %v171 = vld [vmem:[#allocation8 + $0x18] sm:$0xf]
    %v172 = vld [vmem:[#allocation8 + $0x1c] sm:$0xf]
    %v173 = vld [vmem:[#allocation8 + $0x20] sm:$0xf]
    %v174 = vld [vmem:[#allocation8 + $0x24] sm:$0xf]
    %v175 = vld [vmem:[#allocation8 + $0x28] sm:$0xf]
    %v176 = vld [vmem:[#allocation8 + $0x2c] sm:$0xf]
    %v177 = vld [vmem:[#allocation8 + $0x30] sm:$0xf]
    %v178 = vld [vmem:[#allocation8 + $0x34] sm:$0xf]
    %v179 = vld [vmem:[#allocation8 + $0x38] sm:$0xf]
    %v180 = vld [vmem:[#allocation8 + $0x3c] sm:$0xf]
    %v197 = vunpack.c.l.b16 %v165
    %v198 = vunpack.c.l.b16 %v166
    %v199 = vunpack.c.l.b16 %v167
    %v200 = vunpack.c.l.b16 %v168
    %v201 = vunpack.c.l.b16 %v169
    %v202 = vunpack.c.l.b16 %v170
    %v203 = vunpack.c.l.b16 %v171
    %v204 = vunpack.c.l.b16 %v172
    %v205 = vunpack.c.l.b16 %v173
    %v206 = vunpack.c.l.b16 %v174
    %v207 = vunpack.c.l.b16 %v175
    %v208 = vunpack.c.l.b16 %v176
    %v209 = vunpack.c.l.b16 %v177
    %v210 = vunpack.c.l.b16 %v178
    %v211 = vunpack.c.l.b16 %v179
    %v212 = vunpack.c.l.b16 %v180
    %v213 = vpack.c.b16 %v198, %v197
    %v214 = vpack.c.b16 %v200, %v199
    %v215 = vpack.c.b16 %v202, %v201
    %v216 = vpack.c.b16 %v204, %v203
    %v217 = vpack.c.b16 %v206, %v205
    %v218 = vpack.c.b16 %v208, %v207
    %v219 = vpack.c.b16 %v210, %v209
    %v220 = vpack.c.b16 %v212, %v211
    %229 = vmatprep.subr.bf16.mxu0 0
    %230 = vmatpush1.bf16.msra.mxu0 %v213
    %231 = vmatprep.subr.bf16.mxu0 0
    %232 = vmatpush1.bf16.msra.mxu0 %v214
    %233 = vmatprep.subr.bf16.mxu0 0
    %234 = vmatpush1.bf16.msra.mxu0 %v215
    %235 = vmatprep.subr.bf16.mxu0 0
    %236 = vmatpush1.bf16.msra.mxu0 %v216
    %237 = vmatprep.subr.bf16.mxu0 0
    %238 = vmatpush1.bf16.msra.mxu0 %v217
    %239 = vmatprep.subr.bf16.mxu0 0
    %240 = vmatpush1.bf16.msra.mxu0 %v218
    %241 = vmatprep.subr.bf16.mxu0 0
    %242 = vmatpush1.bf16.msra.mxu0 %v219
    %243 = vmatprep.subr.bf16.mxu0 0
    %244 = vmatpush1.bf16.msra.mxu0 %v220
    %245 = vmatprep.subr.bf16.mxu0 0
    %246 = vmatpush1.bf16.msra.mxu0 0
    %247 = vmatprep.subr.bf16.mxu0 0
    %248 = vmatpush1.bf16.msra.mxu0 0
    %249 = vmatprep.subr.bf16.mxu0 0
    %250 = vmatpush1.bf16.msra.mxu0 0
    %251 = vmatprep.subr.bf16.mxu0 0
    %252 = vmatpush1.bf16.msra.mxu0 0
    %253 = vmatprep.subr.bf16.mxu0 0
    %254 = vmatpush1.bf16.msra.mxu0 0
    %255 = vmatprep.subr.bf16.mxu0 0
    %256 = vmatpush1.bf16.msra.mxu0 0
    %257 = vmatprep.subr.bf16.mxu0 0
    %258 = vmatpush1.bf16.msra.mxu0 0
    %259 = vmatprep.subr.bf16.mxu0 0
    %260 = vmatpush1.bf16.msra.mxu0 0
    %261 = vmatprep.mubr.bf16.mxu0 0
    %262 = vmatmul.mubr.bf16.gmra.mrb[0].mxu0 %v164
    %v263 = vpop.f32.mrb[0].mxu0
    %v264 = vadd.f32 0.0, %v263
    %v265 = vpop.f32.mrb[0].mxu0
    %v266 = vpop.f32.mrb[0].mxu0
    %v267 = vadd.f32 0.0, %v266
    %v268 = vpop.f32.mrb[0].mxu0
    %269 = vdwg.mxu0
    %v270 = vadd.f32 %v72, %v264
    %v271 = vadd.f32 %v73, %v267
    %272 = vst.msk [vmem:[#allocation10] sm:$0xff] %vm76, %v270
    %273 = vst.msk [vmem:[#allocation10 + $0x8] sm:$0xff] %vm76, %v271
    // Predicated region
    $region34: #{tpu_custom_call.1} parent=1 // pred_check
      _
    $region35: #{tpu_custom_call.1} parent=1 // pred_check_branch
      %275 = sbr.rel (0) target = $region37
    $region36: #{tpu_custom_call.1} parent=1 // pred_region
      %s277 = ssub.s32 256, 256
      %278 = vsyncadd [#allocation4], %s277
      %s279 = sshll.u32 [#allocation10], 4
      %s280 = int_to_ptr.vmem [resolvable:$true] %s279
      %285 = dma.vmem_to_hbm [thread:$0]  %s280, 256, %s4, [#allocation4], 128, 128, 8
    $region37: #{tpu_custom_call.1} parent=1 // pred_fallthru
      _
    // Predicated region
    $region38: #{tpu_custom_call.1} parent=1 // pred_check
      _
    $region39: #{tpu_custom_call.1} parent=1 // pred_check_branch
      %287 = sbr.rel (0) target = $region41
    $region40: #{tpu_custom_call.1} parent=1 // pred_region
      %288 = dma.done [#allocation4], 256
    $region41: #{tpu_custom_call.1} parent=1 // pred_fallthru
      _
    %289 = vsyncpa [#allocation3], 1
    %290 = vsyncpa [#allocation6], 1
    %291 = vsyncpa [#allocation9], 1
    %292 = vsyncpa [#allocation4], 1

</llo_original>
